<compile_context>
chip_gen: v7x
topology: tpu7x:2x2x1
jax: 0.10.0
libtpu: 0.0.40
codegen_flags: <defaults>
</compile_context>

<pallas_src>
import jax
import jax.numpy as jnp
from jax.experimental import pallas as pl
from jax.experimental.pallas import tpu as pltpu


def _lsum_kernel(cen_ref, embt_ref, out_ref, acc_ref):
    """Softmax denominator over the full vocabulary (uniform multiplicity)."""
    k = pl.program_id(1)

    @pl.when(k == 0)
    def _init():
        acc_ref[...] = jnp.zeros_like(acc_ref)

    # (tb, Ep) @ (Ep, tv) on the MXU, f32 accumulation.
    scores = jnp.dot(cen_ref[...], embt_ref[...], preferred_element_type=jnp.float32)
    # TODO(synk): no log-sum-exp stabilization — faithful to the torch forward.
    acc_ref[...] += jnp.sum(jnp.exp(scores), axis=1, keepdims=True)

    @pl.when(k == pl.num_programs(1) - 1)
    def _fin():
        # Lane-dense unmasked full-tile store; wrapper reads column 0.
        out_ref[...] = jnp.broadcast_to(acc_ref[...], out_ref.shape)


def _lsum_weighted_kernel(cen_ref, embt_ref, counts_ref, out_ref, acc_ref):
    """Softmax denominator with per-(row, vocab-id) multiplicities (general all_vocabs)."""
    k = pl.program_id(1)

    @pl.when(k == 0)
    def _init():
        acc_ref[...] = jnp.zeros_like(acc_ref)

    scores = jnp.dot(cen_ref[...], embt_ref[...], preferred_element_type=jnp.float32)
    e = jnp.exp(scores)
    acc_ref[...] += jnp.sum(counts_ref[...].astype(jnp.float32) * e, axis=1, keepdims=True)

    @pl.when(k == pl.num_programs(1) - 1)
    def _fin():
        out_ref[...] = jnp.broadcast_to(acc_ref[...], out_ref.shape)


def _round_up(x, m):
    return ((x + m - 1) // m) * m


def skipgram_loss(embedding_center, center, outside, all_vocabs, *,
                  tb=128, tv=1024, full_vocab=True, matmul_dtype=jnp.bfloat16):
    """Forward of the PyTorch Skipgram module (all lookups from embedding_center)."""
    V, E = embedding_center.shape
    B = center.shape[0]

    # Clamp / pad to tile multiples.  Padded table rows and embedding dims are zero, so
    # they add 0 to every dot product.
    Ep = _round_up(E, 128)
    tb = min(tb, _round_up(B, 8))
    Bp = _round_up(B, tb)
    tv = min(tv, _round_up(V, 128))
    Vp = _round_up(V, tv)
    nb, nv = Bp // tb, Vp // tv
    OUT_W = 128

    emb_f32 = embedding_center.astype(jnp.float32)

    # Wrapper-side row gathers (O(B*E)); the kernel never stalls on per-row DMAs.
    cen_rows = emb_f32[center.reshape(-1).astype(jnp.int32)]       # (B, E) f32
    out_rows = emb_f32[outside.reshape(-1).astype(jnp.int32)]      # (B, E) f32

    # Low-precision, padded, pre-transposed table: tiles arrive as (Ep, tv) so the MXU
    # contraction needs no per-tile RHS transpose.
    emb_t = jnp.pad(emb_f32, ((0, Vp - V), (0, Ep - E))).astype(matmul_dtype).T   # (Ep, Vp)
    cen = jnp.pad(cen_rows, ((0, Bp - B), (0, Ep - E))).astype(matmul_dtype)      # (Bp, Ep)

    cen_spec = pl.BlockSpec((tb, Ep), lambda i, k: (i, 0))
    # NOTE: if DMA is still exposed after the larger tiles, sweep
    # pipeline_mode=pl.Buffered(3) on this (only) stream whose block index changes
    # every step.
    emb_spec = pl.BlockSpec((Ep, tv), lambda i, k: (0, k))
    out_spec = pl.BlockSpec((tb, OUT_W), lambda i, k: (i, 0))
    compiler_params = pltpu.CompilerParams(
        dimension_semantics=("parallel", "arbitrary"),   # batch tiles shard across TCs (v7x)
        vmem_limit_bytes=32 * 1024 * 1024)               # fits v5e/v6e/v7x scoped VMEM
    out_shape = jax.ShapeDtypeStruct((Bp, OUT_W), jnp.float32)
    scratch = [pltpu.VMEM((tb, 1), jnp.float32)]

    if full_vocab:
        # all_vocabs is the full [0, V) range for every row: exp commutes with the
        # gather, so lsum is just a row-sum of exp(scores); no counts stream at all.
        packed = pl.pallas_call(
            _lsum_kernel,
            out_shape=out_shape,
            grid_spec=pltpu.PrefetchScalarGridSpec(
                num_scalar_prefetch=0, grid=(nb, nv),
                in_specs=[cen_spec, emb_spec],
                out_specs=out_spec, scratch_shapes=scratch),
            compiler_params=compiler_params,
        )(cen, emb_t)
        # Each padded (all-zero) vocab column contributed exp(0) = 1 exactly.
        lsum = packed[:B, 0] - float(Vp - V)
    else:
        # General all_vocabs: per-row multiplicity of each vocab id.
        # bf16 counts are exact for multiplicities < 256 (covers any realistic input).
        counts = jnp.zeros((B, Vp), jnp.float32).at[
            jnp.arange(B, dtype=jnp.int32)[:, None], all_vocabs.astype(jnp.int32)
        ].add(1.0)
        counts = jnp.pad(counts, ((0, Bp - B), (0, 0))).astype(jnp.bfloat16)
        counts_spec = pl.BlockSpec((tb, tv), lambda i, k: (i, k))
        packed = pl.pallas_call(
            _lsum_weighted_kernel,
            out_shape=out_shape,
            grid_spec=pltpu.PrefetchScalarGridSpec(
                num_scalar_prefetch=0, grid=(nb, nv),
                in_specs=[cen_spec, emb_spec, counts_spec],
                out_specs=out_spec, scratch_shapes=scratch),
            compiler_params=compiler_params,
        )(cen, emb_t, counts)
        lsum = packed[:B, 0]

    # Numerator (O(B*E)) and the faithful torch broadcast: (B,1) / (B,) -> (B,B).
    top = jnp.exp(jnp.sum(out_rows * cen_rows, axis=1))            # (B,)
    loss = -jnp.mean(jnp.log(top[:, None] / lsum[None, :]))
    return loss


def reference_loss(embedding_center, center, outside, all_vocabs):
    # Plain-JAX f32 reference mirroring the PyTorch forward (same broadcast quirk).
    ce = embedding_center[center[:, 0]]          # (B, E)
    oe = embedding_center[outside[:, 0]]         # (B, E)
    ae = embedding_center[all_vocabs]            # (B, V, E)
    top = jnp.exp(jnp.einsum('be,be->b', oe, ce))                  # (B,)
    lower = jnp.einsum('bve,be->bv', ae, ce)                       # (B, V)
    lsum = jnp.sum(jnp.exp(lower), axis=1)                         # (B,)
    return -jnp.mean(jnp.log(top[:, None] / lsum[None, :]))


if __name__ == "__main__":
    voc_size, emb_size, batch = 300, 100, 16   # pads to Vp=384, Ep=128, Bp=16

    key = jax.random.PRNGKey(0)
    k_emb_c, k_emb_o, k_cen, k_out, k_av = jax.random.split(key, 5)

    # Scaled-down init keeps the (intentionally unstabilized) exp well inside f32 range.
    embedding_center = 0.3 * jax.random.normal(k_emb_c, (voc_size, emb_size), jnp.float32)
    # embedding_outside exists in __init__ but is unused in forward (behaviour preserved).
    embedding_outside = 0.3 * jax.random.normal(k_emb_o, (voc_size, emb_size), jnp.float32)

    center = jax.random.randint(k_cen, (batch, 1), 0, voc_size, jnp.int32)
    outside = jax.random.randint(k_out, (batch, 1), 0, voc_size, jnp.int32)
    all_vocabs = jnp.broadcast_to(jnp.arange(voc_size, dtype=jnp.int32)[None, :],
                                  (batch, voc_size))

    # Fast path: full-vocab denominator, no counts stream.
    loss = jax.block_until_ready(
        jax.jit(skipgram_loss)(embedding_center, center, outside, all_vocabs))
    ref = reference_loss(embedding_center, center, outside, all_vocabs)
    # bf16 table/center rows perturb the unstabilized exp slightly -> loosened tolerance.
    assert jnp.allclose(loss, ref, rtol=2e-2, atol=2e-2), (loss, ref)

    # Fallback path: arbitrary (repeated) all_vocabs via the weighted kernel.
    all_vocabs_rand = jax.random.randint(k_av, (batch, voc_size), 0, voc_size, jnp.int32)
    loss_w = jax.block_until_ready(
        jax.jit(lambda e, c, o, a: skipgram_loss(e, c, o, a, full_vocab=False))(
            embedding_center, center, outside, all_vocabs_rand))
    ref_w = reference_loss(embedding_center, center, outside, all_vocabs_rand)
    assert jnp.allclose(loss_w, ref_w, rtol=2e-2, atol=2e-2), (loss_w, ref_w)

    print("KERNEL_OK")
</pallas_src>

<mosaic_0001>
module attributes {stable_mosaic.version = 11 : i64} {
  func.func @_lsum_kernel(%arg0: i32, %arg1: i32, %arg2: memref<16x128xbf16, #tpu.memory_space<vmem>>, %arg3: memref<128x384xbf16, #tpu.memory_space<vmem>>, %arg4: memref<16x128xf32, #tpu.memory_space<vmem>>, %arg5: memref<16x1xf32, #tpu.memory_space<vmem>>) attributes {dimension_semantics = [#tpu.dimension_semantics<parallel>, #tpu.dimension_semantics<arbitrary>], iteration_bounds = array<i64: 1, 1>, scalar_prefetch = 0 : i64, scratch_operands = 1 : i64, tpu.core_type = #tpu.core_type<tc>, window_params = [{transform_indices = @transform_0, window_bounds = array<i64: 16, 128>}, {transform_indices = @transform_1, window_bounds = array<i64: 128, 384>}, {transform_indices = @transform_2, window_bounds = array<i64: 16, 128>}]} {
    %c0_i32 = arith.constant 0 : i32
    %0 = arith.cmpi eq, %arg1, %c0_i32 : i32
    %1 = arith.extui %0 : i1 to i32
    %c0_i32_0 = arith.constant 0 : i32
    %2 = arith.cmpi ne, %1, %c0_i32_0 : i32
    scf.if %2 {
      %cst_11 = arith.constant 0.000000e+00 : f32
      %15 = vector.broadcast %cst_11 : f32 to vector<16x1xf32>
      %c0_12 = arith.constant 0 : index
      %c0_13 = arith.constant 0 : index
      %16 = vector.load %arg5[%c0_12, %c0_13] : memref<16x1xf32, #tpu.memory_space<vmem>>, vector<16x1xf32>
      tpu.vector_store %arg5[%c0_12, %c0_13], %15 {strides = array<i32>} : memref<16x1xf32, #tpu.memory_space<vmem>>, vector<16x1xf32>,
    } else {
    }
    %c0 = arith.constant 0 : index
    %c0_1 = arith.constant 0 : index
    %3 = vector.load %arg2[%c0, %c0_1] : memref<16x128xbf16, #tpu.memory_space<vmem>>, vector<16x128xbf16>
    %c0_2 = arith.constant 0 : index
    %c0_3 = arith.constant 0 : index
    %4 = vector.load %arg3[%c0_2, %c0_3] : memref<128x384xbf16, #tpu.memory_space<vmem>>, vector<128x384xbf16>
    %cst = arith.constant dense<0.000000e+00> : vector<16x384xf32>
    %5 = tpu.matmul %3, %4, %cst {dimension_numbers = #tpu.dot_dimension_numbers<[1], [0], [0], [1], [0, 0, 1, 1], [], []>} : vector<16x128xbf16>, vector<128x384xbf16>, vector<16x384xf32> -> vector<16x384xf32>
    %c0_4 = arith.constant 0 : index
    %c0_5 = arith.constant 0 : index
    %6 = vector.load %arg5[%c0_4, %c0_5] : memref<16x1xf32, #tpu.memory_space<vmem>>, vector<16x1xf32>
    %7 = math.exp %5 : vector<16x384xf32>
    %cst_6 = arith.constant dense<0.000000e+00> : vector<16xf32>
    %8 = vector.multi_reduction <add>, %7, %cst_6 [1] : vector<16x384xf32> to vector<16xf32>
    %9 = vector.shape_cast %8 : vector<16xf32> to vector<16x1xf32>
    %10 = arith.addf %6, %9 : vector<16x1xf32>
    %c0_7 = arith.constant 0 : index
    %c0_8 = arith.constant 0 : index
    %11 = vector.load %arg5[%c0_7, %c0_8] : memref<16x1xf32, #tpu.memory_space<vmem>>, vector<16x1xf32>
    tpu.vector_store %arg5[%c0_7, %c0_8], %10 {strides = array<i32>} : memref<16x1xf32, #tpu.memory_space<vmem>>, vector<16x1xf32>,
    %c0_i32_9 = arith.constant 0 : i32
    %12 = arith.cmpi eq, %arg1, %c0_i32_9 : i32
    %13 = arith.extui %12 : i1 to i32
    %c0_i32_10 = arith.constant 0 : i32
    %14 = arith.cmpi ne, %13, %c0_i32_10 : i32
    scf.if %14 {
      %c0_11 = arith.constant 0 : index
      %c0_12 = arith.constant 0 : index
      %15 = vector.load %arg5[%c0_11, %c0_12] : memref<16x1xf32, #tpu.memory_space<vmem>>, vector<16x1xf32>
      %16 = vector.shape_cast %15 : vector<16x1xf32> to vector<16x1xf32>
      %17 = vector.broadcast %16 : vector<16x1xf32> to vector<16x128xf32>
      %c0_13 = arith.constant 0 : index
      %c0_14 = arith.constant 0 : index
      %18 = vector.load %arg4[%c0_13, %c0_14] : memref<16x128xf32, #tpu.memory_space<vmem>>, vector<16x128xf32>
      tpu.vector_store %arg4[%c0_13, %c0_14], %17 {strides = array<i32>} : memref<16x128xf32, #tpu.memory_space<vmem>>, vector<16x128xf32>,
    } else {
    }
    return
  }
  func.func @transform_0(%arg0: i32, %arg1: i32) -> (i32, i32) {
    %c0_i32 = arith.constant 0 : i32
    %c0_i32_0 = arith.constant 0 : i32
    return %arg0, %c0_i32 : i32, i32
  }
  func.func @transform_1(%arg0: i32, %arg1: i32) -> (i32, i32) {
    %c0_i32 = arith.constant 0 : i32
    %c0_i32_0 = arith.constant 0 : i32
    return %c0_i32, %arg1 : i32, i32
  }
  func.func @transform_2(%arg0: i32, %arg1: i32) -> (i32, i32) {
    %c0_i32 = arith.constant 0 : i32
    %c0_i32_0 = arith.constant 0 : i32
    return %arg0, %c0_i32 : i32, i32
  }
}

</mosaic_0001>

<llo_original>
// kernel: skipgram_loss.1
$region0: #{skipgram_loss.1}
  #allocation0 [shape = 'u32[]', space=smem, size = 0x4, offset = 0x4, fixed_abs, tag = 'smem constant byte address 0x4 - core index']
  #allocation1 [shape = 'u32[144,128]{1,0:T(1,128)}', space=vmem, size = 0x12000, scoped, tag = 'internal scratch']
  #allocation2 [shape = 'f32[16,1]{1,0:T(8,128)}', space=vmem, size = 0x2000, scoped, tag = 'scratch operand']
  %s0 = inlined_call_operand.vmem [shape: bf16[16,128], index: 0, kind: input, shape index: {}]
  %s1 = inlined_call_operand.vmem [shape: bf16[128,384], index: 1, kind: input, shape index: {}]
  %s2 = inlined_call_operand.vmem [shape: f32[16,128], index: 2, kind: output, shape index: {}]
  %s3 = sld [smem:[#allocation0]]
  $region26: #{skipgram_loss.1} parent=0
    _
  %s5 = ssub.s32 1, %s3
  %s6 = scalar_select 0, %s5, %s3
  // Predicated region
  $region2: #{skipgram_loss.1} parent=0 // pred_check
    _
  $region3: #{skipgram_loss.1} parent=0 // pred_check_branch
    %8 = sbr.rel (0) target = $region5
  $region4: #{skipgram_loss.1} parent=0 // pred_region
    _
  $region5: #{skipgram_loss.1} parent=0 // pred_fallthru
    _
  // Predicated region
  $region6: #{skipgram_loss.1} parent=0 // pred_check
    _
  $region7: #{skipgram_loss.1} parent=0 // pred_check_branch
    %10 = sbr.rel (0) target = $region9
  $region8: #{skipgram_loss.1} parent=0 // pred_region
    _
  $region9: #{skipgram_loss.1} parent=0 // pred_fallthru
    _
  %p12 = scmp.eq.s32.totalorder 0, 0
  // Predicated region
  $region10: #{skipgram_loss.1} parent=0 // pred_check
    %p13 = pneg %p12
  $region11: #{skipgram_loss.1} parent=0 // pred_check_branch
    %15 = sbr.rel (%p13) target = $region13
  $region12: #{skipgram_loss.1} parent=0 // pred_region
    %vm16 = vcmask 7168
    %17 = vst.msk [vmem:[#allocation2] sm:$0xff] %vm16, 0.0
    %18 = vst.msk [vmem:[#allocation2 + $0x8] sm:$0xff] %vm16, 0.0
  $region13: #{skipgram_loss.1} parent=0 // pred_fallthru
    _
  %v19 = vld [vmem:[%s0] sm:$0xf]
  %v20 = vld [vmem:[%s0 + $0x4] sm:$0xf]
  %v21 = vld [vmem:[%s1] sm:$0xff]
  %v22 = vld [vmem:[%s1 + $0x8] sm:$0xf]
  %v23 = vld [vmem:[%s1 + $0xc] sm:$0xff]
  %v24 = vld [vmem:[%s1 + $0x14] sm:$0xf]
  %v25 = vld [vmem:[%s1 + $0x18] sm:$0xff]
  %v26 = vld [vmem:[%s1 + $0x20] sm:$0xf]
  %v27 = vld [vmem:[%s1 + $0x24] sm:$0xff]
  %v28 = vld [vmem:[%s1 + $0x2c] sm:$0xf]
  %v29 = vld [vmem:[%s1 + $0x30] sm:$0xff]
  %v30 = vld [vmem:[%s1 + $0x38] sm:$0xf]
  %v31 = vld [vmem:[%s1 + $0x3c] sm:$0xff]
  %v32 = vld [vmem:[%s1 + $0x44] sm:$0xf]
  %v33 = vld [vmem:[%s1 + $0x48] sm:$0xff]
  %v34 = vld [vmem:[%s1 + $0x50] sm:$0xf]
  %v35 = vld [vmem:[%s1 + $0x54] sm:$0xff]
  %v36 = vld [vmem:[%s1 + $0x5c] sm:$0xf]
  %v37 = vld [vmem:[%s1 + $0x60] sm:$0xff]
  %v38 = vld [vmem:[%s1 + $0x68] sm:$0xf]
  %v39 = vld [vmem:[%s1 + $0x6c] sm:$0xff]
  %v40 = vld [vmem:[%s1 + $0x74] sm:$0xf]
  %v41 = vld [vmem:[%s1 + $0x78] sm:$0xff]
  %v42 = vld [vmem:[%s1 + $0x80] sm:$0xf]
  %v43 = vld [vmem:[%s1 + $0x84] sm:$0xff]
  %v44 = vld [vmem:[%s1 + $0x8c] sm:$0xf]
  %v45 = vld [vmem:[%s1 + $0x90] sm:$0xff]
  %v46 = vld [vmem:[%s1 + $0x98] sm:$0xf]
  %v47 = vld [vmem:[%s1 + $0x9c] sm:$0xff]
  %v48 = vld [vmem:[%s1 + $0xa4] sm:$0xf]
  %v49 = vld [vmem:[%s1 + $0xa8] sm:$0xff]
  %v50 = vld [vmem:[%s1 + $0xb0] sm:$0xf]
  %v51 = vld [vmem:[%s1 + $0xb4] sm:$0xff]
  %v52 = vld [vmem:[%s1 + $0xbc] sm:$0xf]
  %v55 = vunpack.c.l.b16 %v19
  %v56 = vunpack.c.l.b16 %v20
  %v57 = vpack.c.b16 %v56, %v55
  %v91 = vunpack.c.l.b16 %v21
  %v92 = vunpack.c.h.b16 %v21
  %v93 = vunpack.c.l.b16 %v22
  %v94 = vunpack.c.l.b16 %v23
  %v95 = vunpack.c.h.b16 %v23
  %v96 = vunpack.c.l.b16 %v24
  %v97 = vunpack.c.l.b16 %v25
  %v98 = vunpack.c.h.b16 %v25
  %v99 = vunpack.c.l.b16 %v26
  %v100 = vunpack.c.l.b16 %v27
  %v101 = vunpack.c.h.b16 %v27
  %v102 = vunpack.c.l.b16 %v28
  %v103 = vunpack.c.l.b16 %v29
  %v104 = vunpack.c.h.b16 %v29
  %v105 = vunpack.c.l.b16 %v30
  %v106 = vunpack.c.l.b16 %v31
  %v107 = vunpack.c.h.b16 %v31
  %v108 = vunpack.c.l.b16 %v32
  %v109 = vunpack.c.l.b16 %v33
  %v110 = vunpack.c.h.b16 %v33
  %v111 = vunpack.c.l.b16 %v34
  %v112 = vunpack.c.l.b16 %v35
  %v113 = vunpack.c.h.b16 %v35
  %v114 = vunpack.c.l.b16 %v36
  %v115 = vunpack.c.l.b16 %v37
  %v116 = vunpack.c.h.b16 %v37
  %v117 = vunpack.c.l.b16 %v38
  %v118 = vunpack.c.l.b16 %v39
  %v119 = vunpack.c.h.b16 %v39
  %v120 = vunpack.c.l.b16 %v40
  %v121 = vunpack.c.l.b16 %v41
  %v122 = vunpack.c.h.b16 %v41
  %v123 = vunpack.c.l.b16 %v42
  %v124 = vunpack.c.l.b16 %v43
  %v125 = vunpack.c.h.b16 %v43
  %v126 = vunpack.c.l.b16 %v44
  %v127 = vunpack.c.l.b16 %v45
  %v128 = vunpack.c.h.b16 %v45
  %v129 = vunpack.c.l.b16 %v46
  %v130 = vunpack.c.l.b16 %v47
  %v131 = vunpack.c.h.b16 %v47
  %v132 = vunpack.c.l.b16 %v48
  %v133 = vunpack.c.l.b16 %v49
  %v134 = vunpack.c.h.b16 %v49
  %v135 = vunpack.c.l.b16 %v50
  %v136 = vunpack.c.l.b16 %v51
  %v137 = vunpack.c.h.b16 %v51
  %v138 = vunpack.c.l.b16 %v52
  %v139 = vpack.c.b16 %v94, %v91
  %v140 = vpack.c.b16 %v95, %v92
  %v141 = vpack.c.b16 %v96, %v93
  %v142 = vpack.c.b16 %v100, %v97
  %v143 = vpack.c.b16 %v101, %v98
  %v144 = vpack.c.b16 %v102, %v99
  %v145 = vpack.c.b16 %v106, %v103
  %v146 = vpack.c.b16 %v107, %v104
  %v147 = vpack.c.b16 %v108, %v105
  %v148 = vpack.c.b16 %v112, %v109
  %v149 = vpack.c.b16 %v113, %v110
  %v150 = vpack.c.b16 %v114, %v111
  %v151 = vpack.c.b16 %v118, %v115
  %v152 = vpack.c.b16 %v119, %v116
  %v153 = vpack.c.b16 %v120, %v117
  %v154 = vpack.c.b16 %v124, %v121
  %v155 = vpack.c.b16 %v125, %v122
  %v156 = vpack.c.b16 %v126, %v123
  %v157 = vpack.c.b16 %v130, %v127
  %v158 = vpack.c.b16 %v131, %v128
  %v159 = vpack.c.b16 %v132, %v129
  %v160 = vpack.c.b16 %v136, %v133
  %v161 = vpack.c.b16 %v137, %v134
  %v162 = vpack.c.b16 %v138, %v135
  %187 = vmatprep.subr.bf16.mxu0 %v140
  %188 = vmatpush1.bf16.msra.mxu0 %v139
  %189 = vmatprep.subr.bf16.mxu0 %v143
  %190 = vmatpush1.bf16.msra.mxu0 %v142
  %191 = vmatprep.subr.bf16.mxu0 %v146
  %192 = vmatpush1.bf16.msra.mxu0 %v145
  %193 = vmatprep.subr.bf16.mxu0 %v149
  %194 = vmatpush1.bf16.msra.mxu0 %v148
  %195 = vmatprep.subr.bf16.mxu0 %v152
  %196 = vmatpush1.bf16.msra.mxu0 %v151
  %197 = vmatprep.subr.bf16.mxu0 %v155
  %198 = vmatpush1.bf16.msra.mxu0 %v154
  %199 = vmatprep.subr.bf16.mxu0 %v158
  %200 = vmatpush1.bf16.msra.mxu0 %v157
  %201 = vmatprep.subr.bf16.mxu0 %v161
  %202 = vmatpush1.bf16.msra.mxu0 %v160
  %203 = vmatprep.subr.bf16.mxu0 0
  %204 = vmatpush1.bf16.msra.mxu0 0
  %205 = vmatprep.subr.bf16.mxu0 0
  %206 = vmatpush1.bf16.msra.mxu0 0
  %207 = vmatprep.subr.bf16.mxu0 0
  %208 = vmatpush1.bf16.msra.mxu0 0
  %209 = vmatprep.subr.bf16.mxu0 0
  %210 = vmatpush1.bf16.msra.mxu0 0
  %211 = vmatprep.subr.bf16.mxu0 0
  %212 = vmatpush1.bf16.msra.mxu0 0
  %213 = vmatprep.subr.bf16.mxu0 0
  %214 = vmatpush1.bf16.msra.mxu0 0
  %215 = vmatprep.subr.bf16.mxu0 0
  %216 = vmatpush1.bf16.msra.mxu0 0
  %217 = vmatprep.subr.bf16.mxu0 0
  %218 = vmatpush1.bf16.msra.mxu0 0
  %219 = vmatprep.mubr.bf16.mxu0 0
  %220 = vmatmul.mubr.bf16.gmra.mrb[0].mxu0 %v57
  %v221 = vpop.f32.mrb[0].mxu0
  %v222 = vadd.f32 0.0, %v221
  %v223 = vpop.f32.mrb[0].mxu0
  %v224 = vadd.f32 0.0, %v223
  %v225 = vpop.f32.mrb[0].mxu0
  %v226 = vadd.f32 0.0, %v225
  %v227 = vpop.f32.mrb[0].mxu0
  %v228 = vadd.f32 0.0, %v227
  %229 = vdwg.mxu0
  %230 = vmatprep.subr.bf16.mxu0 0
  %231 = vmatpush1.bf16.msra.mxu0 %v141
  %232 = vmatprep.subr.bf16.mxu0 0
  %233 = vmatpush1.bf16.msra.mxu0 %v144
  %234 = vmatprep.subr.bf16.mxu0 0
  %235 = vmatpush1.bf16.msra.mxu0 %v147
  %236 = vmatprep.subr.bf16.mxu0 0
  %237 = vmatpush1.bf16.msra.mxu0 %v150
  %238 = vmatprep.subr.bf16.mxu0 0
  %239 = vmatpush1.bf16.msra.mxu0 %v153
  %240 = vmatprep.subr.bf16.mxu0 0
  %241 = vmatpush1.bf16.msra.mxu0 %v156
  %242 = vmatprep.subr.bf16.mxu0 0
  %243 = vmatpush1.bf16.msra.mxu0 %v159
  %244 = vmatprep.subr.bf16.mxu0 0
  %245 = vmatpush1.bf16.msra.mxu0 %v162
  %246 = vmatprep.subr.bf16.mxu0 0
  %247 = vmatpush1.bf16.msra.mxu0 0
  %248 = vmatprep.subr.bf16.mxu0 0
  %249 = vmatpush1.bf16.msra.mxu0 0
  %250 = vmatprep.subr.bf16.mxu0 0
  %251 = vmatpush1.bf16.msra.mxu0 0
  %252 = vmatprep.subr.bf16.mxu0 0
  %253 = vmatpush1.bf16.msra.mxu0 0
  %254 = vmatprep.subr.bf16.mxu0 0
  %255 = vmatpush1.bf16.msra.mxu0 0
  %256 = vmatprep.subr.bf16.mxu0 0
  %257 = vmatpush1.bf16.msra.mxu0 0
  %258 = vmatprep.subr.bf16.mxu0 0
  %259 = vmatpush1.bf16.msra.mxu0 0
  %260 = vmatprep.subr.bf16.mxu0 0
  %261 = vmatpush1.bf16.msra.mxu0 0
  %262 = vmatprep.mubr.bf16.mxu0 0
  %263 = vmatmul.mubr.bf16.gmra.mrb[0].mxu0 %v57
  %v264 = vpop.f32.mrb[0].mxu0
  %v265 = vadd.f32 0.0, %v264
  %v266 = vpop.f32.mrb[0].mxu0
  %v267 = vpop.f32.mrb[0].mxu0
  %v268 = vadd.f32 0.0, %v267
  %v269 = vpop.f32.mrb[0].mxu0
  %270 = vdwg.mxu0
  %v271 = vld [vmem:[#allocation2] sm:$0xff]
  %v272 = vld [vmem:[#allocation2 + $0x8] sm:$0xff]
  %v273 = vmul.f32 %v222, 1.442695
  %v274 = vpow.pop %v273
  %v275 = vmul.f32 %v224, 1.442695
  %v276 = vpow.pop %v275
  %v277 = vmul.f32 %v265, 1.442695
  %v278 = vpow.pop %v277
  %v279 = vmul.f32 %v226, 1.442695
  %v280 = vpow.pop %v279
  %v281 = vmul.f32 %v228, 1.442695
  %v282 = vpow.pop %v281
  %v283 = vmul.f32 %v268, 1.442695
  %v284 = vpow.pop %v283
  %v285 = vadd.f32 %v274, %v276
  %v286 = vadd.f32 %v285, %v278
  %287 = vadd.xlane.f32.xlu0 %v286
  %v288 = vpop.xlane.xlu0 %287
  %v289 = vadd.f32 %v280, %v282
  %v290 = vadd.f32 %v289, %v284
  %291 = vadd.xlane.f32.xlu0 %v290
  %v292 = vpop.xlane.xlu0 %291
  %v293 = vadd.f32 %v271, %v288
  %v294 = vadd.f32 %v272, %v292
  %vm295 = vcmask 7168
  %296 = vst.msk [vmem:[#allocation2] sm:$0xff] %vm295, %v293
  %297 = vst.msk [vmem:[#allocation2 + $0x8] sm:$0xff] %vm295, %v294
  // Predicated region
  $region14: #{skipgram_loss.1} parent=0 // pred_check
    %p298 = pneg %p12
  $region15: #{skipgram_loss.1} parent=0 // pred_check_branch
    %300 = sbr.rel (%p298) target = $region17
  $region16: #{skipgram_loss.1} parent=0 // pred_region
    %v301 = vld [vmem:[#allocation2] sm:$0xff]
    %v302 = vld [vmem:[#allocation2 + $0x8] sm:$0xff]
    %304 = vset.pattern.permute.xlu0 0
    %305 = vperm.xlu0 %304, %v301
    %v306 = vpop.permute.xlu0 %305
    %309 = vset.pattern.permute.xlu0 0
    %310 = vperm.xlu0 %309, %v302
    %v311 = vpop.permute.xlu0 %310
    %313 = vst [vmem:[%s2] sm:$0xff] %v306
    %314 = vst [vmem:[%s2 + $0x8] sm:$0xff] %v311
  $region17: #{skipgram_loss.1} parent=0 // pred_fallthru
    _
  // Predicated region
  $region18: #{skipgram_loss.1} parent=0 // pred_check
    _
  $region19: #{skipgram_loss.1} parent=0 // pred_check_branch
    %316 = sbr.rel (0) target = $region21
  $region20: #{skipgram_loss.1} parent=0 // pred_region
    _
  $region21: #{skipgram_loss.1} parent=0 // pred_fallthru
    _
  // Predicated region
  $region22: #{skipgram_loss.1} parent=0 // pred_check
    _
  $region23: #{skipgram_loss.1} parent=0 // pred_check_branch
    %318 = sbr.rel (0) target = $region25
  $region24: #{skipgram_loss.1} parent=0 // pred_region
    _
  $region25: #{skipgram_loss.1} parent=0 // pred_fallthru
    _

</llo_original>
